<compile_context>
chip_gen: v6e
topology: v6e:2x2x1
jax: 0.10.0
libtpu: 0.0.40
codegen_flags: <defaults>
</compile_context>

<pallas_src>
import functools
import math

import jax
import jax.numpy as jnp
from jax.experimental import pallas as pl
from jax.experimental.pallas import tpu as pltpu

EPS = 1e-8

_LANES = 128
_TILE_ROWS = 1024        # (1024, 128) f32 = 512 KiB per input block
_NUM_CORE_SPLITS = 2     # v7x has 2 TensorCores; harmless (serial) on v5e/v6e


def _jaccard_kernel(p_ref, g_ref, o_ref, cap_acc, cup_acc, *,
                    valid_rows, tile_rows, steps_per_core, needs_mask):
    k = pl.program_id(1)

    @pl.when(k == 0)
    def _init():
        cap_acc[...] = jnp.zeros_like(cap_acc)
        cup_acc[...] = jnp.zeros_like(cup_acc)

    # Narrow dtypes (bf16 / int8 / ...) are upcast in-register; no host cast.
    p = p_ref[...].astype(jnp.float32)
    g = g_ref[...].astype(jnp.float32)

    if needs_mask:
        # Zero out rows past the end of the flattened input. Covers both the
        # partial final tile and fully-out-of-range tiles of the core split.
        c = pl.program_id(0)
        row0 = (c * steps_per_core + k) * tile_rows
        row_ids = row0 + jax.lax.broadcasted_iota(jnp.int32, p.shape, 0)
        valid = row_ids < valid_rows
        p = jnp.where(valid, p, 0.0)
        g = jnp.where(valid, g, 0.0)

    # Pure-VPU per-step accumulation; cross-lane reduction deferred to finalize.
    cap_acc[...] += p * g       # |A ∩ B| contributions
    cup_acc[...] += p + g       # |A| + |B| contributions

    @pl.when(k == pl.num_programs(1) - 1)
    def _finalize():
        cap = jnp.sum(cap_acc[...])
        cup = jnp.sum(cup_acc[...])
        col = jax.lax.broadcasted_iota(jnp.int32, o_ref.shape, 1)
        # col 0 holds this core's cap partial, col 1 its cup partial.
        o_ref[...] = jnp.where(col == 0, cap, 0.0) + jnp.where(col == 1, cup, 0.0)


def jaccard(P, G):
    """Pallas implementation of the Jaccard module forward pass (scalar f32)."""
    assert P.shape == G.shape, "P and G must have the same shape"
    total = math.prod(P.shape) if P.shape else 1

    if total % _LANES == 0:
        # Free reshape to a lane-dense 2D slab -- no extra HBM traffic.
        rows = total // _LANES
        p2 = jnp.reshape(P, (rows, _LANES))
        g2 = jnp.reshape(G, (rows, _LANES))
    else:
        # Rare fallback: zero-pad to a lane multiple (zeros are exact for both
        # sums). Only pads to the next 128, not to a full tile.
        padded = ((total + _LANES - 1) // _LANES) * _LANES
        rows = padded // _LANES
        p2 = jnp.zeros((padded,), P.dtype).at[:total].set(jnp.reshape(P, (-1,)))
        g2 = jnp.zeros((padded,), G.dtype).at[:total].set(jnp.reshape(G, (-1,)))
        p2 = p2.reshape(rows, _LANES)
        g2 = g2.reshape(rows, _LANES)

    # Block sizing: biggest tile up to _TILE_ROWS rows; if the whole input is
    # smaller, take it in one block (block == full dim is always legal).
    tile_rows = rows if rows <= _TILE_ROWS else _TILE_ROWS
    steps = -(-rows // tile_rows)
    splits = _NUM_CORE_SPLITS if steps >= _NUM_CORE_SPLITS else 1
    steps_per_core = -(-steps // splits)
    needs_mask = (rows % tile_rows != 0) or (splits * steps_per_core != steps)

    if splits * steps_per_core == steps:
        def in_map(c, k):
            return (c * steps_per_core + k, 0)
    else:
        # Uneven split: clamp the block index in-bounds; the clamped (re-read)
        # tiles are fully masked off in the kernel.
        last_block = steps - 1

        def in_map(c, k):
            return (jnp.minimum(c * steps_per_core + k, last_block), 0)

    kernel = functools.partial(
        _jaccard_kernel,
        valid_rows=rows,
        tile_rows=tile_rows,
        steps_per_core=steps_per_core,
        needs_mask=needs_mask,
    )

    out = pl.pallas_call(
        kernel,
        out_shape=jax.ShapeDtypeStruct((splits * 8, _LANES), jnp.float32),
        grid_spec=pltpu.PrefetchScalarGridSpec(
            num_scalar_prefetch=0,
            grid=(splits, steps_per_core),
            in_specs=[
                pl.BlockSpec((tile_rows, _LANES), in_map),
                pl.BlockSpec((tile_rows, _LANES), in_map),
            ],
            out_specs=pl.BlockSpec((8, _LANES), lambda c, k: (c, 0)),
            scratch_shapes=[
                pltpu.VMEM((tile_rows, _LANES), jnp.float32),  # cap accumulator
                pltpu.VMEM((tile_rows, _LANES), jnp.float32),  # cup accumulator
            ],
        ),
        compiler_params=pltpu.CompilerParams(
            dimension_semantics=("parallel", "arbitrary"),
        ),
    )(p2, g2)

    # Combine per-core partials and finish the scalar ratio in plain JAX.
    parts = out.reshape(splits, 8, _LANES)
    cap = jnp.sum(parts[:, 0, 0])
    cup = jnp.sum(parts[:, 0, 1])
    return cap / (cup - cap + jnp.float32(EPS))


def _jaccard_ref(P, G):
    P = P.astype(jnp.float32)
    G = G.astype(jnp.float32)
    cap = jnp.sum(P * G)
    cup = jnp.sum(P + G)
    return cap / (cup - cap + EPS)


if __name__ == "__main__":
    key = jax.random.PRNGKey(0)

    def check(shape, k):
        kp, kg = jax.random.split(k)
        P = (jax.random.uniform(kp, shape) > 0.5).astype(jnp.float32)
        G = (jax.random.uniform(kg, shape) > 0.5).astype(jnp.float32)
        out = jaccard(P, G)
        jax.block_until_ready(out)
        ref = _jaccard_ref(P, G)
        assert jnp.allclose(out, ref, rtol=1e-5, atol=1e-6), (shape, out, ref)
        return out

    k0, k1, k2 = jax.random.split(key, 3)
    # Small demo shape (B, C, H, W) segmentation-style masks.
    check((2, 4, 16, 16), k0)
    # Multi-step grid with an even 2-way core split.
    check((4, 8, 128, 128), k1)
    # Odd step count: exercises the masked / clamped tail-block path.
    check((1, 10, 256, 256), k2)

    print("KERNEL_OK")
</pallas_src>

<mosaic_0001>
module attributes {stable_mosaic.version = 11 : i64} {
  func.func @_jaccard_kernel(%arg0: i32, %arg1: i32, %arg2: memref<16x128xf32, #tpu.memory_space<vmem>>, %arg3: memref<16x128xf32, #tpu.memory_space<vmem>>, %arg4: memref<8x128xf32, #tpu.memory_space<vmem>>, %arg5: memref<16x128xf32, #tpu.memory_space<vmem>>, %arg6: memref<16x128xf32, #tpu.memory_space<vmem>>) attributes {dimension_semantics = [#tpu.dimension_semantics<parallel>, #tpu.dimension_semantics<arbitrary>], iteration_bounds = array<i64: 1, 1>, scalar_prefetch = 0 : i64, scratch_operands = 2 : i64, tpu.core_type = #tpu.core_type<tc>, window_params = [{transform_indices = @transform_0, window_bounds = array<i64: 16, 128>}, {transform_indices = @transform_1, window_bounds = array<i64: 16, 128>}, {transform_indices = @transform_2, window_bounds = array<i64: 8, 128>}]} {
    %c0_i32 = arith.constant 0 : i32
    %0 = arith.cmpi eq, %arg1, %c0_i32 : i32
    %1 = arith.extui %0 : i1 to i32
    %c0_i32_0 = arith.constant 0 : i32
    %2 = arith.cmpi ne, %1, %c0_i32_0 : i32
    scf.if %2 {
      %cst = arith.constant 0.000000e+00 : f32
      %16 = vector.broadcast %cst : f32 to vector<16x128xf32>
      %c0_14 = arith.constant 0 : index
      %c0_15 = arith.constant 0 : index
      %17 = vector.load %arg5[%c0_14, %c0_15] : memref<16x128xf32, #tpu.memory_space<vmem>>, vector<16x128xf32>
      tpu.vector_store %arg5[%c0_14, %c0_15], %16 {strides = array<i32>} : memref<16x128xf32, #tpu.memory_space<vmem>>, vector<16x128xf32>,
      %cst_16 = arith.constant 0.000000e+00 : f32
      %18 = vector.broadcast %cst_16 : f32 to vector<16x128xf32>
      %c0_17 = arith.constant 0 : index
      %c0_18 = arith.constant 0 : index
      %19 = vector.load %arg6[%c0_17, %c0_18] : memref<16x128xf32, #tpu.memory_space<vmem>>, vector<16x128xf32>
      tpu.vector_store %arg6[%c0_17, %c0_18], %18 {strides = array<i32>} : memref<16x128xf32, #tpu.memory_space<vmem>>, vector<16x128xf32>,
    } else {
    }
    %c0 = arith.constant 0 : index
    %c0_1 = arith.constant 0 : index
    %3 = vector.load %arg2[%c0, %c0_1] : memref<16x128xf32, #tpu.memory_space<vmem>>, vector<16x128xf32>
    %c0_2 = arith.constant 0 : index
    %c0_3 = arith.constant 0 : index
    %4 = vector.load %arg3[%c0_2, %c0_3] : memref<16x128xf32, #tpu.memory_space<vmem>>, vector<16x128xf32>
    %c0_4 = arith.constant 0 : index
    %c0_5 = arith.constant 0 : index
    %5 = vector.load %arg5[%c0_4, %c0_5] : memref<16x128xf32, #tpu.memory_space<vmem>>, vector<16x128xf32>
    %6 = arith.mulf %3, %4 : vector<16x128xf32>
    %7 = arith.addf %5, %6 : vector<16x128xf32>
    %c0_6 = arith.constant 0 : index
    %c0_7 = arith.constant 0 : index
    %8 = vector.load %arg5[%c0_6, %c0_7] : memref<16x128xf32, #tpu.memory_space<vmem>>, vector<16x128xf32>
    tpu.vector_store %arg5[%c0_6, %c0_7], %7 {strides = array<i32>} : memref<16x128xf32, #tpu.memory_space<vmem>>, vector<16x128xf32>,
    %c0_8 = arith.constant 0 : index
    %c0_9 = arith.constant 0 : index
    %9 = vector.load %arg6[%c0_8, %c0_9] : memref<16x128xf32, #tpu.memory_space<vmem>>, vector<16x128xf32>
    %10 = arith.addf %3, %4 : vector<16x128xf32>
    %11 = arith.addf %9, %10 : vector<16x128xf32>
    %c0_10 = arith.constant 0 : index
    %c0_11 = arith.constant 0 : index
    %12 = vector.load %arg6[%c0_10, %c0_11] : memref<16x128xf32, #tpu.memory_space<vmem>>, vector<16x128xf32>
    tpu.vector_store %arg6[%c0_10, %c0_11], %11 {strides = array<i32>} : memref<16x128xf32, #tpu.memory_space<vmem>>, vector<16x128xf32>,
    %c0_i32_12 = arith.constant 0 : i32
    %13 = arith.cmpi eq, %arg1, %c0_i32_12 : i32
    %14 = arith.extui %13 : i1 to i32
    %c0_i32_13 = arith.constant 0 : i32
    %15 = arith.cmpi ne, %14, %c0_i32_13 : i32
    scf.if %15 {
      %c0_14 = arith.constant 0 : index
      %c0_15 = arith.constant 0 : index
      %16 = vector.load %arg5[%c0_14, %c0_15] : memref<16x128xf32, #tpu.memory_space<vmem>>, vector<16x128xf32>
      %17 = vector.shape_cast %16 : vector<16x128xf32> to vector<1x16x128xf32>
      %cst = arith.constant dense<0.000000e+00> : vector<1xf32>
      %18 = vector.multi_reduction <add>, %17, %cst [1, 2] : vector<1x16x128xf32> to vector<1xf32>
      %19 = vector.shape_cast %18 : vector<1xf32> to vector<1x1x1xf32>
      %20 = vector.extract %19[0, 0, 0] : f32 from vector<1x1x1xf32>
      %c0_16 = arith.constant 0 : index
      %c0_17 = arith.constant 0 : index
      %21 = vector.load %arg6[%c0_16, %c0_17] : memref<16x128xf32, #tpu.memory_space<vmem>>, vector<16x128xf32>
      %22 = vector.shape_cast %21 : vector<16x128xf32> to vector<1x16x128xf32>
      %cst_18 = arith.constant dense<0.000000e+00> : vector<1xf32>
      %23 = vector.multi_reduction <add>, %22, %cst_18 [1, 2] : vector<1x16x128xf32> to vector<1xf32>
      %24 = vector.shape_cast %23 : vector<1xf32> to vector<1x1x1xf32>
      %25 = vector.extract %24[0, 0, 0] : f32 from vector<1x1x1xf32>
      %26 = tpu.iota {dimensions = array<i32: 1>} : vector<8x128xi32>
      %c0_i32_19 = arith.constant 0 : i32
      %27 = vector.broadcast %c0_i32_19 : i32 to vector<8x128xi32>
      %28 = arith.cmpi eq, %26, %27 : vector<8x128xi32>
      %cst_20 = arith.constant 0.000000e+00 : f32
      %29 = vector.broadcast %20 : f32 to vector<8x128xf32>
      %30 = vector.broadcast %cst_20 : f32 to vector<8x128xf32>
      %31 = arith.select %28, %29, %30 : vector<8x128xi1>, vector<8x128xf32>
      %c1_i32 = arith.constant 1 : i32
      %32 = vector.broadcast %c1_i32 : i32 to vector<8x128xi32>
      %33 = arith.cmpi eq, %26, %32 : vector<8x128xi32>
      %cst_21 = arith.constant 0.000000e+00 : f32
      %34 = vector.broadcast %25 : f32 to vector<8x128xf32>
      %35 = vector.broadcast %cst_21 : f32 to vector<8x128xf32>
      %36 = arith.select %33, %34, %35 : vector<8x128xi1>, vector<8x128xf32>
      %37 = arith.addf %31, %36 : vector<8x128xf32>
      %c0_22 = arith.constant 0 : index
      %c0_23 = arith.constant 0 : index
      %38 = vector.load %arg4[%c0_22, %c0_23] : memref<8x128xf32, #tpu.memory_space<vmem>>, vector<8x128xf32>
      tpu.vector_store %arg4[%c0_22, %c0_23], %37 {strides = array<i32>} : memref<8x128xf32, #tpu.memory_space<vmem>>, vector<8x128xf32>,
    } else {
    }
    return
  }
  func.func @transform_0(%arg0: i32, %arg1: i32) -> (i32, i32) {
    %c1_i32 = arith.constant 1 : i32
    %0 = arith.muli %arg0, %c1_i32 : i32
    %1 = arith.addi %0, %arg1 : i32
    %c0_i32 = arith.constant 0 : i32
    %c0_i32_0 = arith.constant 0 : i32
    return %1, %c0_i32 : i32, i32
  }
  func.func @transform_1(%arg0: i32, %arg1: i32) -> (i32, i32) {
    %c1_i32 = arith.constant 1 : i32
    %0 = arith.muli %arg0, %c1_i32 : i32
    %1 = arith.addi %0, %arg1 : i32
    %c0_i32 = arith.constant 0 : i32
    %c0_i32_0 = arith.constant 0 : i32
    return %1, %c0_i32 : i32, i32
  }
  func.func @transform_2(%arg0: i32, %arg1: i32) -> (i32, i32) {
    %c0_i32 = arith.constant 0 : i32
    %c0_i32_0 = arith.constant 0 : i32
    return %arg0, %c0_i32 : i32, i32
  }
}

</mosaic_0001>

<llo_original>
// kernel: tpu_custom_call.1
$region0: #{tpu_custom_call.1}
  #allocation0 [shape = 'u32[]', space=smem, size = 0x4, offset = 0x4, fixed_abs, tag = 'smem constant byte address 0x4 - core index']
  #allocation1 [shape = 'u32[144,128]{1,0:T(1,128)}', space=vmem, size = 0x12000, scoped, tag = 'internal scratch']
  #allocation2 [shape = 'f32[16,128]{1,0:T(8,128)}', space=vmem, size = 0x2000, scoped, tag = 'scratch operand']
  #allocation3 [shape = 'f32[16,128]{1,0:T(8,128)}', space=vmem, size = 0x2000, scoped, tag = 'scratch operand']
  %s0 = inlined_call_operand.hbm [shape: f32[16,128], index: 0, kind: input, shape index: {}]
  %s1 = inlined_call_operand.hbm [shape: f32[16,128], index: 1, kind: input, shape index: {}]
  %s2 = inlined_call_operand.hbm [shape: f32[8,128], index: 2, kind: output, shape index: {}]
  %s3 = sld [smem:[#allocation0]]
  $region34: #{tpu_custom_call.1} parent=0
    _
  %s5 = ssub.s32 1, %s3
  %s6 = scalar_select 0, %s5, %s3
  $region1: #{tpu_custom_call.1} parent=0
    #allocation4 [shape = 'u8[8192]{0}', space=vmem, size = 0x2000, scoped, tag = 'input window, operand 0, single buffered']
    #allocation5 [shape = 's32[1]{0}', space=sflag, size = 0x4, scoped, tag = 'scoped memory for tpu_custom_call.1']
    #allocation6 [shape = 's32[1]{0}', space=sflag, size = 0x4, scoped, tag = 'scoped memory for tpu_custom_call.1']
    #allocation7 [shape = 'u8[8192]{0}', space=vmem, size = 0x2000, scoped, tag = 'input window, operand 1, single buffered']
    #allocation8 [shape = 's32[1]{0}', space=sflag, size = 0x4, scoped, tag = 'scoped memory for tpu_custom_call.1']
    #allocation9 [shape = 'u8[4096]{0}', space=vmem, size = 0x1000, scoped, tag = 'output window, operand 0, single buffered']
    %7 = vsyncpa [#allocation5], 0
    %8 = vsyncpa [#allocation8], 0
    %9 = vsyncpa [#allocation6], 0
    // Predicated region
    $region2: #{tpu_custom_call.1} parent=1 // pred_check
      _
    $region3: #{tpu_custom_call.1} parent=1 // pred_check_branch
      %11 = sbr.rel (0) target = $region5
    $region4: #{tpu_custom_call.1} parent=1 // pred_region
      %s12 = sadd.s32 0, 0
      %s13 = smul.u32 2, %s12
      %s15 = ssub.s32 256, 256
      %16 = vsyncadd [#allocation5], %s15
      %s17 = smul.addr %s13, 128
      %s18 = scalar_lea.hbm %s0, %s17
      %s19 = sshll.u32 [#allocation4], 4
      %s20 = int_to_ptr.vmem [resolvable:$true] %s19
      %25 = dma.hbm_to_vmem [thread:$0]  %s18, 256, %s20, [#allocation5], 128, 128, 8
    $region5: #{tpu_custom_call.1} parent=1 // pred_fallthru
      _
    // Predicated region
    $region6: #{tpu_custom_call.1} parent=1 // pred_check
      _
    $region7: #{tpu_custom_call.1} parent=1 // pred_check_branch
      %27 = sbr.rel (0) target = $region9
    $region8: #{tpu_custom_call.1} parent=1 // pred_region
      %s28 = sadd.s32 0, 0
      %s29 = smul.u32 2, %s28
      %s31 = ssub.s32 256, 256
      %32 = vsyncadd [#allocation8], %s31
      %s33 = smul.addr %s29, 128
      %s34 = scalar_lea.hbm %s1, %s33
      %s35 = sshll.u32 [#allocation7], 4
      %s36 = int_to_ptr.vmem [resolvable:$true] %s35
      %41 = dma.hbm_to_vmem [thread:$0]  %s34, 256, %s36, [#allocation8], 128, 128, 8
    $region9: #{tpu_custom_call.1} parent=1 // pred_fallthru
      _
    // Predicated region
    $region10: #{tpu_custom_call.1} parent=1 // pred_check
      _
    $region11: #{tpu_custom_call.1} parent=1 // pred_check_branch
      %43 = sbr.rel (0) target = $region13
    $region12: #{tpu_custom_call.1} parent=1 // pred_region
      %44 = dma.done [#allocation5], 256
    $region13: #{tpu_custom_call.1} parent=1 // pred_fallthru
      _
    // Predicated region
    $region14: #{tpu_custom_call.1} parent=1 // pred_check
      _
    $region15: #{tpu_custom_call.1} parent=1 // pred_check_branch
      %46 = sbr.rel (0) target = $region17
    $region16: #{tpu_custom_call.1} parent=1 // pred_region
      %47 = dma.done [#allocation8], 256
    $region17: #{tpu_custom_call.1} parent=1 // pred_fallthru
      _
    %s48 = sadd.s32 0, 0
    %s49 = smul.u32 2, %s48
    %s50 = sadd.s32 0, 0
    %s51 = smul.u32 2, %s50
    %p52 = scmp.eq.s32.totalorder 0, 0
    // Predicated region
    $region18: #{tpu_custom_call.1} parent=1 // pred_check
      %p53 = pneg %p52
    $region19: #{tpu_custom_call.1} parent=1 // pred_check_branch
      %55 = sbr.rel (%p53) target = $region21
    $region20: #{tpu_custom_call.1} parent=1 // pred_region
      %56 = vst [vmem:[#allocation2] sm:$0xff] 0.0
      %57 = vst [vmem:[#allocation2 + $0x8] sm:$0xff] 0.0
      %58 = vst [vmem:[#allocation3] sm:$0xff] 0.0
      %59 = vst [vmem:[#allocation3 + $0x8] sm:$0xff] 0.0
    $region21: #{tpu_custom_call.1} parent=1 // pred_fallthru
      _
    %v60 = vld [vmem:[#allocation4] sm:$0xff]
    %v61 = vld [vmem:[#allocation4 + $0x8] sm:$0xff]
    %v62 = vld [vmem:[#allocation7] sm:$0xff]
    %v63 = vld [vmem:[#allocation7 + $0x8] sm:$0xff]
    %v64 = vld [vmem:[#allocation2] sm:$0xff]
    %v65 = vld [vmem:[#allocation2 + $0x8] sm:$0xff]
    %v66 = vmul.f32 %v60, %v62
    %v67 = vmul.f32 %v61, %v63
    %v68 = vadd.f32 %v64, %v66
    %v69 = vadd.f32 %v65, %v67
    %70 = vst [vmem:[#allocation2] sm:$0xff] %v68
    %71 = vst [vmem:[#allocation2 + $0x8] sm:$0xff] %v69
    %v72 = vld [vmem:[#allocation3] sm:$0xff]
    %v73 = vld [vmem:[#allocation3 + $0x8] sm:$0xff]
    %v74 = vadd.f32 %v60, %v62
    %v75 = vadd.f32 %v61, %v63
    %v76 = vadd.f32 %v72, %v74
    %v77 = vadd.f32 %v73, %v75
    %78 = vst [vmem:[#allocation3] sm:$0xff] %v76
    %79 = vst [vmem:[#allocation3 + $0x8] sm:$0xff] %v77
    // Predicated region
    $region22: #{tpu_custom_call.1} parent=1 // pred_check
      %p80 = pneg %p52
    $region23: #{tpu_custom_call.1} parent=1 // pred_check_branch
      %82 = sbr.rel (%p80) target = $region25
    $region24: #{tpu_custom_call.1} parent=1 // pred_region
      %v83 = vld [vmem:[#allocation2] sm:$0xff]
      %v84 = vld [vmem:[#allocation2 + $0x8] sm:$0xff]
      %v85 = vadd.f32 %v83, %v84
      %86 = vadd.xlane.f32.xlu0 %v85
      %v87 = vpop.xlane.xlu0 %86
      %v88 = vrot.slane %v87, 4
      %v89 = vadd.f32 %v87, %v88
      %v90 = vrot.slane %v89, 2
      %v91 = vadd.f32 %v89, %v90
      %v92 = vrot.slane %v91, 1
      %v93 = vadd.f32 %v91, %v92
      %s94 = vtos %v93
      %v95 = vld [vmem:[#allocation3] sm:$0xff]
      %v96 = vld [vmem:[#allocation3 + $0x8] sm:$0xff]
      %v97 = vadd.f32 %v95, %v96
      %98 = vadd.xlane.f32.xlu0 %v97
      %v99 = vpop.xlane.xlu0 %98
      %v100 = vrot.slane %v99, 4
      %v101 = vadd.f32 %v99, %v100
      %v102 = vrot.slane %v101, 2
      %v103 = vadd.f32 %v101, %v102
      %v104 = vrot.slane %v103, 1
      %v105 = vadd.f32 %v103, %v104
      %s106 = vtos %v105
      %v107 = vlaneseq
      %v108 = vand.u32 %v107, 127
      %vm109 = vcmp.eq.s32.totalorder %v108, 0
      %v110 = vstv %s94
      %v111 = vsel %vm109, %v110, 0.0
      %vm112 = vcmp.eq.s32.totalorder %v108, 1
      %v113 = vstv %s106
      %v114 = vsel %vm112, %v113, 0.0
      %v115 = vadd.f32 %v111, %v114
      %116 = vst [vmem:[#allocation9] sm:$0xff] %v115
    $region25: #{tpu_custom_call.1} parent=1 // pred_fallthru
      _
    // Predicated region
    $region26: #{tpu_custom_call.1} parent=1 // pred_check
      _
    $region27: #{tpu_custom_call.1} parent=1 // pred_check_branch
      %118 = sbr.rel (0) target = $region29
    $region28: #{tpu_custom_call.1} parent=1 // pred_region
      %s120 = ssub.s32 128, 128
      %121 = vsyncadd [#allocation6], %s120
      %s123 = sshll.u32 [#allocation9], 4
      %s124 = int_to_ptr.vmem [resolvable:$true] %s123
      %126 = dma.vmem_to_hbm [thread:$0]  %s124, 128, %s2, [#allocation6]
    $region29: #{tpu_custom_call.1} parent=1 // pred_fallthru
      _
    // Predicated region
    $region30: #{tpu_custom_call.1} parent=1 // pred_check
      _
    $region31: #{tpu_custom_call.1} parent=1 // pred_check_branch
      %128 = sbr.rel (0) target = $region33
    $region32: #{tpu_custom_call.1} parent=1 // pred_region
      %129 = dma.done [#allocation6], 128
    $region33: #{tpu_custom_call.1} parent=1 // pred_fallthru
      _
    %130 = vsyncpa [#allocation5], 1
    %131 = vsyncpa [#allocation8], 1
    %132 = vsyncpa [#allocation6], 1

</llo_original>
